<compile_context>
chip_gen: v7x
topology: tpu7x:2x2x1
jax: 0.10.0
libtpu: 0.0.40
codegen_flags: <defaults>
</compile_context>

<pallas_src>
import functools

import jax
import jax.numpy as jnp
from jax.experimental import pallas as pl
from jax.experimental.pallas import tpu as pltpu


def _round_up(v, m):
    return ((v + m - 1) // m) * m


def _device_kind():
    try:
        return jax.devices()[0].device_kind.lower()
    except Exception:  # pragma: no cover - CPU fallback / interpret mode
        return ""


def _integro_kernel(x_ref, f_ref, bint_ref,
                    w1a_ref, w1b_ref, b1_ref,
                    w2_ref, b2_ref, w2p_ref, b2p_ref,
                    o_ref, acc_ref,
                    *, d_a, n_valid, tiles_per_partial, n_int,
                    need_mask, act_dtype):
    """One batch tile (batch on the lane axis): module(x), module(x_comb),
    residual, fused SquaredError with a lane-parallel accumulator."""
    p = pl.program_id(0)
    t = pl.program_id(1)

    @pl.when(t == 0)
    def _():
        acc_ref[...] = jnp.zeros_like(acc_ref)

    xa = x_ref[:d_a, :]                      # (d_a,  tile_n) x-space coords
    xb = x_ref[d_a:, :]                      # (d_int, tile_n) integral coords

    # ---- module(x): first layer split by coordinate group so the x-space
    # contribution (a0) is reused for every combined/integral point. --------
    a0 = jnp.dot(w1a_ref[...], xa,
                 preferred_element_type=jnp.float32) + b1_ref[...]   # (H, tn)
    c = jnp.dot(w1b_ref[...], xb,
                preferred_element_type=jnp.float32)                  # (H, tn)
    h_main = jnp.tanh((a0 + c).astype(act_dtype)).astype(jnp.float32)
    pred = jnp.dot(w2_ref[...], h_main,
                   preferred_element_type=jnp.float32) + b2_ref[...]  # (Do,tn)

    # ---- module(x_combined): integral-space coords replaced by x_int[j].
    # b_int (= W1b^T x_int^T + nothing) is precomputed in the wrapper. ------
    bi = bint_ref[...]                                               # (H, M)
    h_sum = jnp.zeros(a0.shape, jnp.float32)
    # static unroll: M (integral points) is small; switch to lax.fori_loop
    # with b_int on the sublane axis if M ever grows beyond ~32.
    for j in range(n_int):
        z = (a0 + bi[:, j:j + 1]).astype(act_dtype)
        h_sum = h_sum + jnp.tanh(z).astype(jnp.float32)
    # mean over integral points; parameter already folded into w2p/b2p.
    pred_int = (jnp.dot(w2p_ref[...], h_sum,
                        preferred_element_type=jnp.float32) * (1.0 / n_int)
                + b2p_ref[...])                                      # (Do,tn)

    # residual_fn:  u(x) - param * (1/M) sum_j u(x_comb_j) - f(x)
    r = pred - pred_int - f_ref[...]

    if need_mask:                   # zero out padded batch columns (static)
        tile_n = r.shape[1]
        col = ((p * tiles_per_partial + t) * tile_n
               + jax.lax.broadcasted_iota(jnp.int32, r.shape, 1))
        r = jnp.where(col < n_valid, r, 0.0)

    # SquaredError + batch-sum, lane-parallel: reduce space dim and lane-tile
    # chunks with (mostly) VPU adds; cross-lane reduce deferred to wrapper.
    part = jnp.sum((r * r).reshape(r.shape[0], -1, 128), axis=(0, 1))  # (128,)
    acc_ref[...] += part.reshape(1, 128)

    @pl.when(t == tiles_per_partial - 1)
    def _():
        # lane-dense (1, 8, 128) store of the per-partial lane sums.
        o_ref[...] = jnp.zeros(o_ref.shape, jnp.float32) + acc_ref[...]


def integro_pinn_loss(x, x_int, f, w1, b1, w2, b2, param,
                      *, tile_cap=None, num_partials=None,
                      bf16_activations=False):
    """loss = mean_i sum_d ( u(x_i) - param * mean_j u(x_comb_ij) - f(x_i) )_d^2"""
    kind = _device_kind()
    is_v5e = ("v5e" in kind) or ("v5 lite" in kind) or ("v5lite" in kind)
    if num_partials is None:
        # v7x has 2 TensorCores/chip -> shard the batch across them via the
        # leading "parallel" grid axis; single-TC chips keep one partial.
        num_partials = 2 if "v7" in kind else 1
    if tile_cap is None:
        # Working set per tile is (H, tile_n) f32 intermediates + one packed
        # (Din, tile_n) input stream; 8192 fits the 32 MiB scoped-VMEM default
        # of v6e/v7x, 4096 keeps headroom under v5e's 16 MiB default.
        tile_cap = 4096 if is_v5e else 8192
    act_dtype = jnp.bfloat16 if bf16_activations else jnp.float32

    n, d_in = x.shape
    m, d_int = x_int.shape
    d_a = d_in - d_int
    d_out = f.shape[1]
    hdim = w1.shape[1]
    assert d_a > 0 and w2.shape == (hdim, d_out) and param.shape == (1, d_out)

    p_parts = num_partials
    # Balanced tiles: choose the tile count first, then an (almost) equal
    # 128-aligned tile size, so masked padding is bounded by <128 columns.
    tiles = pl.cdiv(n, p_parts * tile_cap)
    tile_n = min(_round_up(pl.cdiv(n, p_parts * tiles), 128), tile_cap)
    n_pad = p_parts * tiles * tile_n
    if n_pad != n:
        x = jnp.pad(x, ((0, n_pad - n), (0, 0)))
        f = jnp.pad(f, ((0, n_pad - n), (0, 0)))

    # Transposed ("batch on lanes") operands; parameter folded into the
    # integral-branch output weights/bias (mathematically exact); the
    # tile-invariant b_int = W1b^T x_int^T precomputed here.
    x_t = x.T                                 # (d_in,  n_pad) packed slab
    f_t = f.T                                 # (d_out, n_pad)
    w1a_t = w1[:d_a, :].T                     # (h, d_a)
    w1b_t = w1[d_a:, :].T                     # (h, d_int)
    b1_t = b1.reshape(1, hdim).T              # (h, 1)
    bint_t = w1b_t @ x_int.T                  # (h, m)   tile-invariant
    w2_t = w2.T                               # (d_out, h)
    b2_t = b2.reshape(1, d_out).T             # (d_out, 1)
    w2p_t = (w2 * param).T                    # (d_out, h)
    b2p_t = (b2.reshape(1, d_out) * param).T  # (d_out, 1)

    kernel = functools.partial(
        _integro_kernel, d_a=d_a, n_valid=n, tiles_per_partial=tiles,
        n_int=m, need_mask=(n_pad != n), act_dtype=act_dtype)

    def batch_map(pi, ti):
        return (0, pi * tiles + ti)

    def resident(pi, ti):
        return (0, 0)

    flops = (2 * n_pad * hdim * (d_in + 2 * d_out)
             + 2 * n_pad * m * hdim + 2 * m * d_int * hdim)
    cost = pl.CostEstimate(
        flops=int(flops),
        transcendentals=int(n_pad * hdim * (1 + m)),
        bytes_accessed=int(4 * (n_pad * (d_in + d_out) + m * hdim
                                + 2 * hdim * (d_in + d_out + 1)
                                + p_parts * 8 * 128)),
    )

    partials = pl.pallas_call(
        kernel,
        out_shape=jax.ShapeDtypeStruct((p_parts, 8, 128), jnp.float32),
        grid_spec=pltpu.PrefetchScalarGridSpec(
            num_scalar_prefetch=0,
            grid=(p_parts, tiles),
            in_specs=[
                pl.BlockSpec((d_in, tile_n), batch_map),    # packed x slab
                pl.BlockSpec((d_out, tile_n), batch_map),   # data function f(x)
                pl.BlockSpec((hdim, m), resident),          # b_int (resident)
                pl.BlockSpec((hdim, d_a), resident),        # W1a^T
                pl.BlockSpec((hdim, d_int), resident),      # W1b^T
                pl.BlockSpec((hdim, 1), resident),          # b1^T
                pl.BlockSpec((d_out, hdim), resident),      # W2^T
                pl.BlockSpec((d_out, 1), resident),         # b2^T
                pl.BlockSpec((d_out, hdim), resident),      # (W2*param)^T
                pl.BlockSpec((d_out, 1), resident),         # (b2*param)^T
            ],
            out_specs=pl.BlockSpec((1, 8, 128), lambda pi, ti: (pi, 0, 0)),
            scratch_shapes=[pltpu.VMEM((1, 128), jnp.float32)],
        ),
        compiler_params=pltpu.CompilerParams(
            dimension_semantics=("parallel", "arbitrary")),
        cost_estimate=cost,
    )(x_t, f_t, bint_t, w1a_t, w1b_t, b1_t, w2_t, b2_t, w2p_t, b2p_t)

    # reduce_fn = torch.mean over the per-sample SquaredError values
    # (single cross-lane reduce of the lane-parallel partial sums).
    return jnp.sum(partials[:, 0, :]) / jnp.float32(n)


def _reference_loss(x, x_int, f, w1, b1, w2, b2, param):
    """Pure-JAX reference mirroring IntegroPINNCondition.forward step by step."""
    n, _ = x.shape
    m, d_int = x_int.shape
    d_a = x.shape[1] - d_int
    y = jnp.tanh(x @ w1 + b1) @ w2 + b2                       # module(x)
    x_comb = jnp.concatenate(
        [jnp.broadcast_to(x[:, None, :d_a], (n, m, d_a)),
         jnp.broadcast_to(x_int[None, :, :], (n, m, d_int))], axis=-1)
    y_int = jnp.tanh(x_comb @ w1 + b1) @ w2 + b2              # module(x_comb)
    residual = y - param * jnp.mean(y_int, axis=1) - f        # residual_fn
    unreduced = jnp.sum(residual ** 2, axis=1)                # SquaredError
    return jnp.mean(unreduced)                                # reduce_fn


if __name__ == "__main__":
    # Small deterministic setup: N points over an 8-D input space whose last
    # 4 coordinates are the integral variables; M integral-sampler points.
    N, M = 256, 16
    D_A, D_INT, D_OUT, H = 4, 4, 4, 32
    D_IN = D_A + D_INT

    key = jax.random.PRNGKey(0)
    kx, ki, kf, kw1, kb1, kw2, kb2, kp = jax.random.split(key, 8)

    x = jax.random.normal(kx, (N, D_IN), dtype=jnp.float32)
    x_int = jax.random.normal(ki, (M, D_INT), dtype=jnp.float32)
    f = jax.random.normal(kf, (N, D_OUT), dtype=jnp.float32)   # data_function

    w1 = 0.3 * jax.random.normal(kw1, (D_IN, H), dtype=jnp.float32)
    b1 = 0.1 * jax.random.normal(kb1, (1, H), dtype=jnp.float32)
    w2 = 0.3 * jax.random.normal(kw2, (H, D_OUT), dtype=jnp.float32)
    b2 = 0.1 * jax.random.normal(kb2, (1, D_OUT), dtype=jnp.float32)
    param = 1.0 + 0.1 * jax.random.normal(kp, (1, D_OUT), dtype=jnp.float32)

    # ---- f32 path (default) --------------------------------------------------
    loss_fn = jax.jit(integro_pinn_loss)
    loss = loss_fn(x, x_int, f, w1, b1, w2, b2, param)
    jax.block_until_ready(loss)
    loss_ref = _reference_loss(x, x_int, f, w1, b1, w2, b2, param)
    assert jnp.allclose(loss, loss_ref, rtol=1e-4, atol=1e-5), (loss, loss_ref)

    # ---- masked / padded-tile path (N not a multiple of 128) -----------------
    N2 = 200
    loss2 = loss_fn(x[:N2], x_int, f[:N2], w1, b1, w2, b2, param)
    jax.block_until_ready(loss2)
    loss2_ref = _reference_loss(x[:N2], x_int, f[:N2], w1, b1, w2, b2, param)
    assert jnp.allclose(loss2, loss2_ref, rtol=1e-4, atol=1e-5), (loss2, loss2_ref)

    # ---- bf16-activation path (EUP-bound lever on v6e/v7x only) --------------
    kind = _device_kind()
    if ("v6" in kind) or ("v7" in kind):
        loss_bf16_fn = jax.jit(functools.partial(integro_pinn_loss,
                                                 bf16_activations=True))
        loss_bf16 = loss_bf16_fn(x, x_int, f, w1, b1, w2, b2, param)
        jax.block_until_ready(loss_bf16)
        assert jnp.isfinite(loss_bf16)
        rel = jnp.abs(loss_bf16 - loss_ref) / jnp.maximum(jnp.abs(loss_ref), 1e-6)
        assert rel < 0.1, (loss_bf16, loss_ref)

    print("KERNEL_OK")
</pallas_src>

<mosaic_0001>
module attributes {stable_mosaic.version = 11 : i64} {
  func.func @_integro_kernel(%arg0: i32, %arg1: i32, %arg2: memref<8x256xf32, #tpu.memory_space<vmem>>, %arg3: memref<4x256xf32, #tpu.memory_space<vmem>>, %arg4: memref<32x16xf32, #tpu.memory_space<vmem>>, %arg5: memref<32x4xf32, #tpu.memory_space<vmem>>, %arg6: memref<32x4xf32, #tpu.memory_space<vmem>>, %arg7: memref<32x1xf32, #tpu.memory_space<vmem>>, %arg8: memref<4x32xf32, #tpu.memory_space<vmem>>, %arg9: memref<4x1xf32, #tpu.memory_space<vmem>>, %arg10: memref<4x32xf32, #tpu.memory_space<vmem>>, %arg11: memref<4x1xf32, #tpu.memory_space<vmem>>, %arg12: memref<1x8x128xf32, #tpu.memory_space<vmem>>, %arg13: memref<1x128xf32, #tpu.memory_space<vmem>>) attributes {dimension_semantics = [#tpu.dimension_semantics<parallel>, #tpu.dimension_semantics<arbitrary>], iteration_bounds = array<i64: 1, 1>, scalar_prefetch = 0 : i64, scratch_operands = 1 : i64, tpu.core_type = #tpu.core_type<tc>, window_params = [{transform_indices = @transform_0, window_bounds = array<i64: 8, 256>}, {transform_indices = @transform_1, window_bounds = array<i64: 4, 256>}, {pipeline_mode = #tpu.pipeline_mode<synchronous>, transform_indices = @transform_2, window_bounds = array<i64: 32, 16>}, {pipeline_mode = #tpu.pipeline_mode<synchronous>, transform_indices = @transform_3, window_bounds = array<i64: 32, 4>}, {pipeline_mode = #tpu.pipeline_mode<synchronous>, transform_indices = @transform_4, window_bounds = array<i64: 32, 4>}, {pipeline_mode = #tpu.pipeline_mode<synchronous>, transform_indices = @transform_5, window_bounds = array<i64: 32, 1>}, {pipeline_mode = #tpu.pipeline_mode<synchronous>, transform_indices = @transform_6, window_bounds = array<i64: 4, 32>}, {pipeline_mode = #tpu.pipeline_mode<synchronous>, transform_indices = @transform_7, window_bounds = array<i64: 4, 1>}, {pipeline_mode = #tpu.pipeline_mode<synchronous>, transform_indices = @transform_8, window_bounds = array<i64: 4, 32>}, {pipeline_mode = #tpu.pipeline_mode<synchronous>, transform_indices = @transform_9, window_bounds = array<i64: 4, 1>}, {transform_indices = @transform_10, window_bounds = array<i64: 1, 8, 128>}]} {
    %c0_i32 = arith.constant 0 : i32
    %0 = arith.cmpi eq, %arg1, %c0_i32 : i32
    %1 = arith.extui %0 : i1 to i32
    %c0_i32_0 = arith.constant 0 : i32
    %2 = arith.cmpi ne, %1, %c0_i32_0 : i32
    scf.if %2 {
      %cst_33 = arith.constant 0.000000e+00 : f32
      %121 = vector.broadcast %cst_33 : f32 to vector<1x128xf32>
      %c0_34 = arith.constant 0 : index
      %c0_35 = arith.constant 0 : index
      %122 = vector.load %arg13[%c0_34, %c0_35] : memref<1x128xf32, #tpu.memory_space<vmem>>, vector<1x128xf32>
      tpu.vector_store %arg13[%c0_34, %c0_35], %121 {strides = array<i32>} : memref<1x128xf32, #tpu.memory_space<vmem>>, vector<1x128xf32>,
    } else {
    }
    %c0 = arith.constant 0 : index
    %c0_1 = arith.constant 0 : index
    %3 = vector.load %arg2[%c0, %c0_1] : memref<8x256xf32, #tpu.memory_space<vmem>>, vector<4x256xf32>
    %c4 = arith.constant 4 : index
    %c0_2 = arith.constant 0 : index
    %4 = vector.load %arg2[%c4, %c0_2] : memref<8x256xf32, #tpu.memory_space<vmem>>, vector<4x256xf32>
    %c0_3 = arith.constant 0 : index
    %c0_4 = arith.constant 0 : index
    %5 = vector.load %arg5[%c0_3, %c0_4] : memref<32x4xf32, #tpu.memory_space<vmem>>, vector<32x4xf32>
    %cst = arith.constant dense<0.000000e+00> : vector<32x256xf32>
    %6 = tpu.matmul %5, %3, %cst {dimension_numbers = #tpu.dot_dimension_numbers<[1], [0], [0], [1], [0, 0, 1, 1], [], []>} : vector<32x4xf32>, vector<4x256xf32>, vector<32x256xf32> -> vector<32x256xf32>
    %c0_5 = arith.constant 0 : index
    %c0_6 = arith.constant 0 : index
    %7 = vector.load %arg7[%c0_5, %c0_6] : memref<32x1xf32, #tpu.memory_space<vmem>>, vector<32x1xf32>
    %8 = vector.broadcast %7 : vector<32x1xf32> to vector<32x256xf32>
    %9 = arith.addf %6, %8 : vector<32x256xf32>
    %c0_7 = arith.constant 0 : index
    %c0_8 = arith.constant 0 : index
    %10 = vector.load %arg6[%c0_7, %c0_8] : memref<32x4xf32, #tpu.memory_space<vmem>>, vector<32x4xf32>
    %cst_9 = arith.constant dense<0.000000e+00> : vector<32x256xf32>
    %11 = tpu.matmul %10, %4, %cst_9 {dimension_numbers = #tpu.dot_dimension_numbers<[1], [0], [0], [1], [0, 0, 1, 1], [], []>} : vector<32x4xf32>, vector<4x256xf32>, vector<32x256xf32> -> vector<32x256xf32>
    %12 = arith.addf %9, %11 : vector<32x256xf32>
    %13 = math.tanh %12 : vector<32x256xf32>
    %c0_10 = arith.constant 0 : index
    %c0_11 = arith.constant 0 : index
    %14 = vector.load %arg8[%c0_10, %c0_11] : memref<4x32xf32, #tpu.memory_space<vmem>>, vector<4x32xf32>
    %cst_12 = arith.constant dense<0.000000e+00> : vector<4x256xf32>
    %15 = tpu.matmul %14, %13, %cst_12 {dimension_numbers = #tpu.dot_dimension_numbers<[1], [0], [0], [1], [0, 0, 1, 1], [], []>} : vector<4x32xf32>, vector<32x256xf32>, vector<4x256xf32> -> vector<4x256xf32>
    %c0_13 = arith.constant 0 : index
    %c0_14 = arith.constant 0 : index
    %16 = vector.load %arg9[%c0_13, %c0_14] : memref<4x1xf32, #tpu.memory_space<vmem>>, vector<4x1xf32>
    %17 = vector.broadcast %16 : vector<4x1xf32> to vector<4x256xf32>
    %18 = arith.addf %15, %17 : vector<4x256xf32>
    %c0_15 = arith.constant 0 : index
    %c0_16 = arith.constant 0 : index
    %19 = vector.load %arg4[%c0_15, %c0_16] : memref<32x16xf32, #tpu.memory_space<vmem>>, vector<32x16xf32>
    %cst_17 = arith.constant 0.000000e+00 : f32
    %20 = vector.broadcast %cst_17 : f32 to vector<32x256xf32>
    %21 = vector.extract_strided_slice %19 {offsets = [0, 0], sizes = [32, 1], strides = [1, 1]} : vector<32x16xf32> to vector<32x1xf32>
    %22 = vector.broadcast %21 : vector<32x1xf32> to vector<32x256xf32>
    %23 = arith.addf %9, %22 : vector<32x256xf32>
    %24 = math.tanh %23 : vector<32x256xf32>
    %25 = arith.addf %20, %24 : vector<32x256xf32>
    %26 = vector.extract_strided_slice %19 {offsets = [0, 1], sizes = [32, 1], strides = [1, 1]} : vector<32x16xf32> to vector<32x1xf32>
    %27 = vector.broadcast %26 : vector<32x1xf32> to vector<32x256xf32>
    %28 = arith.addf %9, %27 : vector<32x256xf32>
    %29 = math.tanh %28 : vector<32x256xf32>
    %30 = arith.addf %25, %29 : vector<32x256xf32>
    %31 = vector.extract_strided_slice %19 {offsets = [0, 2], sizes = [32, 1], strides = [1, 1]} : vector<32x16xf32> to vector<32x1xf32>
    %32 = vector.broadcast %31 : vector<32x1xf32> to vector<32x256xf32>
    %33 = arith.addf %9, %32 : vector<32x256xf32>
    %34 = math.tanh %33 : vector<32x256xf32>
    %35 = arith.addf %30, %34 : vector<32x256xf32>
    %36 = vector.extract_strided_slice %19 {offsets = [0, 3], sizes = [32, 1], strides = [1, 1]} : vector<32x16xf32> to vector<32x1xf32>
    %37 = vector.broadcast %36 : vector<32x1xf32> to vector<32x256xf32>
    %38 = arith.addf %9, %37 : vector<32x256xf32>
    %39 = math.tanh %38 : vector<32x256xf32>
    %40 = arith.addf %35, %39 : vector<32x256xf32>
    %41 = vector.extract_strided_slice %19 {offsets = [0, 4], sizes = [32, 1], strides = [1, 1]} : vector<32x16xf32> to vector<32x1xf32>
    %42 = vector.broadcast %41 : vector<32x1xf32> to vector<32x256xf32>
    %43 = arith.addf %9, %42 : vector<32x256xf32>
    %44 = math.tanh %43 : vector<32x256xf32>
    %45 = arith.addf %40, %44 : vector<32x256xf32>
    %46 = vector.extract_strided_slice %19 {offsets = [0, 5], sizes = [32, 1], strides = [1, 1]} : vector<32x16xf32> to vector<32x1xf32>
    %47 = vector.broadcast %46 : vector<32x1xf32> to vector<32x256xf32>
    %48 = arith.addf %9, %47 : vector<32x256xf32>
    %49 = math.tanh %48 : vector<32x256xf32>
    %50 = arith.addf %45, %49 : vector<32x256xf32>
    %51 = vector.extract_strided_slice %19 {offsets = [0, 6], sizes = [32, 1], strides = [1, 1]} : vector<32x16xf32> to vector<32x1xf32>
    %52 = vector.broadcast %51 : vector<32x1xf32> to vector<32x256xf32>
    %53 = arith.addf %9, %52 : vector<32x256xf32>
    %54 = math.tanh %53 : vector<32x256xf32>
    %55 = arith.addf %50, %54 : vector<32x256xf32>
    %56 = vector.extract_strided_slice %19 {offsets = [0, 7], sizes = [32, 1], strides = [1, 1]} : vector<32x16xf32> to vector<32x1xf32>
    %57 = vector.broadcast %56 : vector<32x1xf32> to vector<32x256xf32>
    %58 = arith.addf %9, %57 : vector<32x256xf32>
    %59 = math.tanh %58 : vector<32x256xf32>
    %60 = arith.addf %55, %59 : vector<32x256xf32>
    %61 = vector.extract_strided_slice %19 {offsets = [0, 8], sizes = [32, 1], strides = [1, 1]} : vector<32x16xf32> to vector<32x1xf32>
    %62 = vector.broadcast %61 : vector<32x1xf32> to vector<32x256xf32>
    %63 = arith.addf %9, %62 : vector<32x256xf32>
    %64 = math.tanh %63 : vector<32x256xf32>
    %65 = arith.addf %60, %64 : vector<32x256xf32>
    %66 = vector.extract_strided_slice %19 {offsets = [0, 9], sizes = [32, 1], strides = [1, 1]} : vector<32x16xf32> to vector<32x1xf32>
    %67 = vector.broadcast %66 : vector<32x1xf32> to vector<32x256xf32>
    %68 = arith.addf %9, %67 : vector<32x256xf32>
    %69 = math.tanh %68 : vector<32x256xf32>
    %70 = arith.addf %65, %69 : vector<32x256xf32>
    %71 = vector.extract_strided_slice %19 {offsets = [0, 10], sizes = [32, 1], strides = [1, 1]} : vector<32x16xf32> to vector<32x1xf32>
    %72 = vector.broadcast %71 : vector<32x1xf32> to vector<32x256xf32>
    %73 = arith.addf %9, %72 : vector<32x256xf32>
    %74 = math.tanh %73 : vector<32x256xf32>
    %75 = arith.addf %70, %74 : vector<32x256xf32>
    %76 = vector.extract_strided_slice %19 {offsets = [0, 11], sizes = [32, 1], strides = [1, 1]} : vector<32x16xf32> to vector<32x1xf32>
    %77 = vector.broadcast %76 : vector<32x1xf32> to vector<32x256xf32>
    %78 = arith.addf %9, %77 : vector<32x256xf32>
    %79 = math.tanh %78 : vector<32x256xf32>
    %80 = arith.addf %75, %79 : vector<32x256xf32>
    %81 = vector.extract_strided_slice %19 {offsets = [0, 12], sizes = [32, 1], strides = [1, 1]} : vector<32x16xf32> to vector<32x1xf32>
    %82 = vector.broadcast %81 : vector<32x1xf32> to vector<32x256xf32>
    %83 = arith.addf %9, %82 : vector<32x256xf32>
    %84 = math.tanh %83 : vector<32x256xf32>
    %85 = arith.addf %80, %84 : vector<32x256xf32>
    %86 = vector.extract_strided_slice %19 {offsets = [0, 13], sizes = [32, 1], strides = [1, 1]} : vector<32x16xf32> to vector<32x1xf32>
    %87 = vector.broadcast %86 : vector<32x1xf32> to vector<32x256xf32>
    %88 = arith.addf %9, %87 : vector<32x256xf32>
    %89 = math.tanh %88 : vector<32x256xf32>
    %90 = arith.addf %85, %89 : vector<32x256xf32>
    %91 = vector.extract_strided_slice %19 {offsets = [0, 14], sizes = [32, 1], strides = [1, 1]} : vector<32x16xf32> to vector<32x1xf32>
    %92 = vector.broadcast %91 : vector<32x1xf32> to vector<32x256xf32>
    %93 = arith.addf %9, %92 : vector<32x256xf32>
    %94 = math.tanh %93 : vector<32x256xf32>
    %95 = arith.addf %90, %94 : vector<32x256xf32>
    %96 = vector.extract_strided_slice %19 {offsets = [0, 15], sizes = [32, 1], strides = [1, 1]} : vector<32x16xf32> to vector<32x1xf32>
    %97 = vector.broadcast %96 : vector<32x1xf32> to vector<32x256xf32>
    %98 = arith.addf %9, %97 : vector<32x256xf32>
    %99 = math.tanh %98 : vector<32x256xf32>
    %100 = arith.addf %95, %99 : vector<32x256xf32>
    %c0_18 = arith.constant 0 : index
    %c0_19 = arith.constant 0 : index
    %101 = vector.load %arg10[%c0_18, %c0_19] : memref<4x32xf32, #tpu.memory_space<vmem>>, vector<4x32xf32>
    %cst_20 = arith.constant dense<0.000000e+00> : vector<4x256xf32>
    %102 = tpu.matmul %101, %100, %cst_20 {dimension_numbers = #tpu.dot_dimension_numbers<[1], [0], [0], [1], [0, 0, 1, 1], [], []>} : vector<4x32xf32>, vector<32x256xf32>, vector<4x256xf32> -> vector<4x256xf32>
    %cst_21 = arith.constant 6.250000e-02 : f32
    %103 = vector.broadcast %cst_21 : f32 to vector<4x256xf32>
    %104 = arith.mulf %102, %103 : vector<4x256xf32>
    %c0_22 = arith.constant 0 : index
    %c0_23 = arith.constant 0 : index
    %105 = vector.load %arg11[%c0_22, %c0_23] : memref<4x1xf32, #tpu.memory_space<vmem>>, vector<4x1xf32>
    %106 = vector.broadcast %105 : vector<4x1xf32> to vector<4x256xf32>
    %107 = arith.addf %104, %106 : vector<4x256xf32>
    %108 = arith.subf %18, %107 : vector<4x256xf32>
    %c0_24 = arith.constant 0 : index
    %c0_25 = arith.constant 0 : index
    %109 = vector.load %arg3[%c0_24, %c0_25] : memref<4x256xf32, #tpu.memory_space<vmem>>, vector<4x256xf32>
    %110 = arith.subf %108, %109 : vector<4x256xf32>
    %111 = arith.mulf %110, %110 : vector<4x256xf32>
    %112 = vector.shape_cast %111 : vector<4x256xf32> to vector<4x2x128xf32>
    %cst_26 = arith.constant dense<0.000000e+00> : vector<128xf32>
    %113 = vector.multi_reduction <add>, %112, %cst_26 [0, 1] : vector<4x2x128xf32> to vector<128xf32>
    %c0_27 = arith.constant 0 : index
    %c0_28 = arith.constant 0 : index
    %114 = vector.load %arg13[%c0_27, %c0_28] : memref<1x128xf32, #tpu.memory_space<vmem>>, vector<1x128xf32>
    %115 = vector.shape_cast %113 : vector<128xf32> to vector<1x128xf32>
    %116 = arith.addf %114, %115 : vector<1x128xf32>
    %c0_29 = arith.constant 0 : index
    %c0_30 = arith.constant 0 : index
    %117 = vector.load %arg13[%c0_29, %c0_30] : memref<1x128xf32, #tpu.memory_space<vmem>>, vector<1x128xf32>
    tpu.vector_store %arg13[%c0_29, %c0_30], %116 {strides = array<i32>} : memref<1x128xf32, #tpu.memory_space<vmem>>, vector<1x128xf32>,
    %c0_i32_31 = arith.constant 0 : i32
    %118 = arith.cmpi eq, %arg1, %c0_i32_31 : i32
    %119 = arith.extui %118 : i1 to i32
    %c0_i32_32 = arith.constant 0 : i32
    %120 = arith.cmpi ne, %119, %c0_i32_32 : i32
    scf.if %120 {
      %cst_33 = arith.constant 0.000000e+00 : f32
      %121 = vector.broadcast %cst_33 : f32 to vector<1x8x128xf32>
      %c0_34 = arith.constant 0 : index
      %c0_35 = arith.constant 0 : index
      %122 = vector.load %arg13[%c0_34, %c0_35] : memref<1x128xf32, #tpu.memory_space<vmem>>, vector<1x128xf32>
      %123 = vector.shape_cast %122 : vector<1x128xf32> to vector<1x1x128xf32>
      %124 = vector.broadcast %123 : vector<1x1x128xf32> to vector<1x8x128xf32>
      %125 = arith.addf %121, %124 : vector<1x8x128xf32>
      %c0_36 = arith.constant 0 : index
      %c0_37 = arith.constant 0 : index
      %c0_38 = arith.constant 0 : index
      %126 = vector.load %arg12[%c0_36, %c0_37, %c0_38] : memref<1x8x128xf32, #tpu.memory_space<vmem>>, vector<1x8x128xf32>
      tpu.vector_store %arg12[%c0_36, %c0_37, %c0_38], %125 {strides = array<i32>} : memref<1x8x128xf32, #tpu.memory_space<vmem>>, vector<1x8x128xf32>,
    } else {
    }
    return
  }
  func.func @transform_0(%arg0: i32, %arg1: i32) -> (i32, i32) {
    %c1_i32 = arith.constant 1 : i32
    %0 = arith.muli %arg0, %c1_i32 : i32
    %1 = arith.addi %0, %arg1 : i32
    %c0_i32 = arith.constant 0 : i32
    %c0_i32_0 = arith.constant 0 : i32
    return %c0_i32, %1 : i32, i32
  }
  func.func @transform_1(%arg0: i32, %arg1: i32) -> (i32, i32) {
    %c1_i32 = arith.constant 1 : i32
    %0 = arith.muli %arg0, %c1_i32 : i32
    %1 = arith.addi %0, %arg1 : i32
    %c0_i32 = arith.constant 0 : i32
    %c0_i32_0 = arith.constant 0 : i32
    return %c0_i32, %1 : i32, i32
  }
  func.func @transform_2(%arg0: i32, %arg1: i32) -> (i32, i32) {
    %c0_i32 = arith.constant 0 : i32
    %c0_i32_0 = arith.constant 0 : i32
    %c0_i32_1 = arith.constant 0 : i32
    return %c0_i32, %c0_i32_0 : i32, i32
  }
  func.func @transform_3(%arg0: i32, %arg1: i32) -> (i32, i32) {
    %c0_i32 = arith.constant 0 : i32
    %c0_i32_0 = arith.constant 0 : i32
    %c0_i32_1 = arith.constant 0 : i32
    return %c0_i32, %c0_i32_0 : i32, i32
  }
  func.func @transform_4(%arg0: i32, %arg1: i32) -> (i32, i32) {
    %c0_i32 = arith.constant 0 : i32
    %c0_i32_0 = arith.constant 0 : i32
    %c0_i32_1 = arith.constant 0 : i32
    return %c0_i32, %c0_i32_0 : i32, i32
  }
  func.func @transform_5(%arg0: i32, %arg1: i32) -> (i32, i32) {
    %c0_i32 = arith.constant 0 : i32
    %c0_i32_0 = arith.constant 0 : i32
    %c0_i32_1 = arith.constant 0 : i32
    return %c0_i32, %c0_i32_0 : i32, i32
  }
  func.func @transform_6(%arg0: i32, %arg1: i32) -> (i32, i32) {
    %c0_i32 = arith.constant 0 : i32
    %c0_i32_0 = arith.constant 0 : i32
    %c0_i32_1 = arith.constant 0 : i32
    return %c0_i32, %c0_i32_0 : i32, i32
  }
  func.func @transform_7(%arg0: i32, %arg1: i32) -> (i32, i32) {
    %c0_i32 = arith.constant 0 : i32
    %c0_i32_0 = arith.constant 0 : i32
    %c0_i32_1 = arith.constant 0 : i32
    return %c0_i32, %c0_i32_0 : i32, i32
  }
  func.func @transform_8(%arg0: i32, %arg1: i32) -> (i32, i32) {
    %c0_i32 = arith.constant 0 : i32
    %c0_i32_0 = arith.constant 0 : i32
    %c0_i32_1 = arith.constant 0 : i32
    return %c0_i32, %c0_i32_0 : i32, i32
  }
  func.func @transform_9(%arg0: i32, %arg1: i32) -> (i32, i32) {
    %c0_i32 = arith.constant 0 : i32
    %c0_i32_0 = arith.constant 0 : i32
    %c0_i32_1 = arith.constant 0 : i32
    return %c0_i32, %c0_i32_0 : i32, i32
  }
  func.func @transform_10(%arg0: i32, %arg1: i32) -> (i32, i32, i32) {
    %c0_i32 = arith.constant 0 : i32
    %c0_i32_0 = arith.constant 0 : i32
    %c0_i32_1 = arith.constant 0 : i32
    return %arg0, %c0_i32, %c0_i32_0 : i32, i32, i32
  }
}

</mosaic_0001>

<llo_original>
// kernel: integro_pinn_loss.1
$region0: #{integro_pinn_loss.1}
  #allocation0 [shape = 'u32[]', space=smem, size = 0x4, offset = 0x4, fixed_abs, tag = 'smem constant byte address 0x4 - core index']
  #allocation1 [shape = 'u32[144,128]{1,0:T(1,128)}', space=vmem, size = 0x12000, scoped, tag = 'internal scratch']
  #allocation2 [shape = 'f32[1,128]{1,0:T(1,128)}', space=vmem, size = 0x200, scoped, tag = 'scratch operand']
  %s0 = inlined_call_operand.vmem [shape: f32[8,256], index: 0, kind: input, shape index: {}]
  %s1 = inlined_call_operand.vmem [shape: f32[4,256], index: 1, kind: input, shape index: {}]
  %s2 = inlined_call_operand.vmem [shape: f32[32,16], index: 2, kind: input, shape index: {}]
  %s3 = inlined_call_operand.vmem [shape: f32[32,4], index: 3, kind: input, shape index: {}]
  %s4 = inlined_call_operand.vmem [shape: f32[32,4], index: 4, kind: input, shape index: {}]
  %s5 = inlined_call_operand.vmem [shape: f32[32,1], index: 5, kind: input, shape index: {}]
  %s6 = inlined_call_operand.vmem [shape: f32[4,32], index: 6, kind: input, shape index: {}]
  %s7 = inlined_call_operand.vmem [shape: f32[4,1], index: 7, kind: input, shape index: {}]
  %s8 = inlined_call_operand.vmem [shape: f32[4,32], index: 8, kind: input, shape index: {}]
  %s9 = inlined_call_operand.vmem [shape: f32[4,1], index: 9, kind: input, shape index: {}]
  %s10 = inlined_call_operand.vmem [shape: f32[1,8,128], index: 10, kind: output, shape index: {}]
  %s11 = sld [smem:[#allocation0]]
  $region58: #{integro_pinn_loss.1} parent=0
    _
  %s13 = ssub.s32 1, %s11
  %s14 = scalar_select 0, %s13, %s11
  // Predicated region
  $region2: #{integro_pinn_loss.1} parent=0 // pred_check
    _
  $region3: #{integro_pinn_loss.1} parent=0 // pred_check_branch
    %16 = sbr.rel (0) target = $region5
  $region4: #{integro_pinn_loss.1} parent=0 // pred_region
    %s17 = sadd.s32 0, 0
    %s18 = smul.u32 2, %s17
    %p19 = scmp.lt.s32.totalorder %s18, 1
    %s20 = scalar_select %p19, %s18, 1
    %s21 = smul.addr %s20, 8
    %s22 = scalar_lea.vmem %s0, %s21
    %s23 = sadd.s32 0, 0
    %s24 = smul.u32 2, %s23
  $region5: #{integro_pinn_loss.1} parent=0 // pred_fallthru
    _
  // Predicated region
  $region6: #{integro_pinn_loss.1} parent=0 // pred_check
    _
  $region7: #{integro_pinn_loss.1} parent=0 // pred_check_branch
    %26 = sbr.rel (0) target = $region9
  $region8: #{integro_pinn_loss.1} parent=0 // pred_region
    %s27 = sadd.s32 0, 0
    %s28 = smul.u32 2, %s27
    %p29 = scmp.lt.s32.totalorder %s28, 1
    %s30 = scalar_select %p29, %s28, 1
    %s31 = smul.addr %s30, 4
    %s32 = scalar_lea.vmem %s1, %s31
    %s33 = sadd.s32 0, 0
    %s34 = smul.u32 2, %s33
  $region9: #{integro_pinn_loss.1} parent=0 // pred_fallthru
    _
  // Predicated region
  $region10: #{integro_pinn_loss.1} parent=0 // pred_check
    _
  $region11: #{integro_pinn_loss.1} parent=0 // pred_check_branch
    %36 = sbr.rel (0) target = $region13
  $region12: #{integro_pinn_loss.1} parent=0 // pred_region
    _
  $region13: #{integro_pinn_loss.1} parent=0 // pred_fallthru
    _
  // Predicated region
  $region14: #{integro_pinn_loss.1} parent=0 // pred_check
    _
  $region15: #{integro_pinn_loss.1} parent=0 // pred_check_branch
    %38 = sbr.rel (0) target = $region17
  $region16: #{integro_pinn_loss.1} parent=0 // pred_region
    _
  $region17: #{integro_pinn_loss.1} parent=0 // pred_fallthru
    _
  // Predicated region
  $region18: #{integro_pinn_loss.1} parent=0 // pred_check
    _
  $region19: #{integro_pinn_loss.1} parent=0 // pred_check_branch
    %40 = sbr.rel (0) target = $region21
  $region20: #{integro_pinn_loss.1} parent=0 // pred_region
    _
  $region21: #{integro_pinn_loss.1} parent=0 // pred_fallthru
    _
  // Predicated region
  $region22: #{integro_pinn_loss.1} parent=0 // pred_check
    _
  $region23: #{integro_pinn_loss.1} parent=0 // pred_check_branch
    %42 = sbr.rel (0) target = $region25
  $region24: #{integro_pinn_loss.1} parent=0 // pred_region
    _
  $region25: #{integro_pinn_loss.1} parent=0 // pred_fallthru
    _
  // Predicated region
  $region26: #{integro_pinn_loss.1} parent=0 // pred_check
    _
  $region27: #{integro_pinn_loss.1} parent=0 // pred_check_branch
    %44 = sbr.rel (0) target = $region29
  $region28: #{integro_pinn_loss.1} parent=0 // pred_region
    _
  $region29: #{integro_pinn_loss.1} parent=0 // pred_fallthru
    _
  // Predicated region
  $region30: #{integro_pinn_loss.1} parent=0 // pred_check
    _
  $region31: #{integro_pinn_loss.1} parent=0 // pred_check_branch
    %46 = sbr.rel (0) target = $region33
  $region32: #{integro_pinn_loss.1} parent=0 // pred_region
    _
  $region33: #{integro_pinn_loss.1} parent=0 // pred_fallthru
    _
  // Predicated region
  $region34: #{integro_pinn_loss.1} parent=0 // pred_check
    _
  $region35: #{integro_pinn_loss.1} parent=0 // pred_check_branch
    %48 = sbr.rel (0) target = $region37
  $region36: #{integro_pinn_loss.1} parent=0 // pred_region
    _
  $region37: #{integro_pinn_loss.1} parent=0 // pred_fallthru
    _
  // Predicated region
  $region38: #{integro_pinn_loss.1} parent=0 // pred_check
    _
  $region39: #{integro_pinn_loss.1} parent=0 // pred_check_branch
    %50 = sbr.rel (0) target = $region41
  $region40: #{integro_pinn_loss.1} parent=0 // pred_region
    _
  $region41: #{integro_pinn_loss.1} parent=0 // pred_fallthru
    _
  %s51 = sadd.s32 0, 0
  %s52 = smul.u32 2, %s51
  %p53 = scmp.lt.s32.totalorder %s52, 1
  %s54 = scalar_select %p53, %s52, 1
  %s55 = smul.addr %s54, 8
  %s56 = scalar_lea.vmem %s0, %s55
  %s57 = sadd.s32 0, 0
  %s58 = smul.u32 2, %s57
  %p59 = scmp.lt.s32.totalorder %s58, 1
  %s60 = scalar_select %p59, %s58, 1
  %s61 = smul.addr %s60, 4
  %s62 = scalar_lea.vmem %s1, %s61
  %s63 = sadd.s32 0, 0
  %s64 = smul.u32 2, %s63
  %p65 = scmp.lt.s32.totalorder %s64, 1
  %s66 = scalar_select %p65, %s64, 1
  %s67 = smul.addr %s66, 8
  %s68 = scalar_lea.vmem %s0, %s67
  %s69 = sadd.s32 0, 0
  %s70 = smul.u32 2, %s69
  %s71 = sadd.s32 0, 0
  %s72 = smul.u32 2, %s71
  %p73 = scmp.lt.s32.totalorder %s72, 1
  %s74 = scalar_select %p73, %s72, 1
  %s75 = smul.addr %s74, 4
  %s76 = scalar_lea.vmem %s1, %s75
  %s77 = sadd.s32 0, 0
  %s78 = smul.u32 2, %s77
  %p79 = scmp.eq.s32.totalorder 0, 0
  // Predicated region
  $region42: #{integro_pinn_loss.1} parent=0 // pred_check
    %p80 = pneg %p79
  $region43: #{integro_pinn_loss.1} parent=0 // pred_check_branch
    %82 = sbr.rel (%p80) target = $region45
  $region44: #{integro_pinn_loss.1} parent=0 // pred_region
    %83 = vst [vmem:[#allocation2] sm:$0x1] 0.0
  $region45: #{integro_pinn_loss.1} parent=0 // pred_fallthru
    _
  %v84 = vld [vmem:[%s68] sm:$0xf]
  %v85 = vld [vmem:[%s68 + $0x8] sm:$0xf]
  %v86 = vld [vmem:[%s68] sm:$0xf0]
  %v87 = vld [vmem:[%s68 + $0x8] sm:$0xf0]
  %v88 = vld [vmem:[%s3] sm:$0xff]
  %v89 = vld [vmem:[%s3 + $0x8] sm:$0xff]
  %v90 = vld [vmem:[%s3 + $0x10] sm:$0xff]
  %v91 = vld [vmem:[%s3 + $0x18] sm:$0xff]
  %v92 = vld [vmem:[%s5] sm:$0xff]
  %v93 = vld [vmem:[%s5 + $0x8] sm:$0xff]
  %v94 = vld [vmem:[%s5 + $0x10] sm:$0xff]
  %v95 = vld [vmem:[%s5 + $0x18] sm:$0xff]
  %97 = vset.pattern.permute.xlu0 0
  %98 = vperm.xlu0 %97, %v92
  %v99 = vpop.permute.xlu0 %98
  %102 = vset.pattern.permute.xlu0 0
  %103 = vperm.xlu0 %102, %v93
  %v104 = vpop.permute.xlu0 %103
  %107 = vset.pattern.permute.xlu0 0
  %108 = vperm.xlu0 %107, %v94
  %v109 = vpop.permute.xlu0 %108
  %112 = vset.pattern.permute.xlu0 0
  %113 = vperm.xlu0 %112, %v95
  %v114 = vpop.permute.xlu0 %113
  %vm116 = vcmask 31744
  %v118 = vsel %vm116, %v88, 0
  %v121 = vsel %vm116, %v89, 0
  %v124 = vsel %vm116, %v90, 0
  %v127 = vsel %vm116, %v91, 0
  %vm129 = vcmask 1043456
  %v131 = vsel %vm129, %v84, 0
  %v134 = vsel %vm129, %v85, 0
  %136 = vmatprep.subr.mxu0 %v134
  %137 = vmatpush1.msra.mxu0 %v131
  %138 = vmatprep.subr.mxu0 0.0
  %139 = vmatpush1.msra.mxu0 0.0
  %140 = vmatprep.subr.mxu0 0.0
  %141 = vmatpush1.msra.mxu0 0.0
  %142 = vmatprep.subr.mxu0 0.0
  %143 = vmatpush1.msra.mxu0 0.0
  %144 = vmatprep.subr.mxu0 0.0
  %145 = vmatpush1.msra.mxu0 0.0
  %146 = vmatprep.subr.mxu0 0.0
  %147 = vmatpush1.msra.mxu0 0.0
  %148 = vmatprep.subr.mxu0 0.0
  %149 = vmatpush1.msra.mxu0 0.0
  %150 = vmatprep.subr.mxu0 0.0
  %151 = vmatpush1.msra.mxu0 0.0
  %152 = vmatprep.subr.mxu0 0.0
  %153 = vmatpush1.msra.mxu0 0.0
  %154 = vmatprep.subr.mxu0 0.0
  %155 = vmatpush1.msra.mxu0 0.0
  %156 = vmatprep.subr.mxu0 0.0
  %157 = vmatpush1.msra.mxu0 0.0
  %158 = vmatprep.subr.mxu0 0.0
  %159 = vmatpush1.msra.mxu0 0.0
  %160 = vmatprep.subr.mxu0 0.0
  %161 = vmatpush1.msra.mxu0 0.0
  %162 = vmatprep.subr.mxu0 0.0
  %163 = vmatpush1.msra.mxu0 0.0
  %164 = vmatprep.subr.mxu0 0.0
  %165 = vmatpush1.msra.mxu0 0.0
  %166 = vmatprep.subr.mxu0 0.0
  %167 = vmatpush1.msra.mxu0 0.0
  %168 = vmatprep.subr.mxu0 0.0
  %169 = vmatpush1.msra.mxu0 0.0
  %170 = vmatprep.subr.mxu0 0.0
  %171 = vmatpush1.msra.mxu0 0.0
  %172 = vmatprep.subr.mxu0 0.0
  %173 = vmatpush1.msra.mxu0 0.0
  %174 = vmatprep.subr.mxu0 0.0
  %175 = vmatpush1.msra.mxu0 0.0
  %176 = vmatprep.subr.mxu0 0.0
  %177 = vmatpush1.msra.mxu0 0.0
  %178 = vmatprep.subr.mxu0 0.0
  %179 = vmatpush1.msra.mxu0 0.0
  %180 = vmatprep.subr.mxu0 0.0
  %181 = vmatpush1.msra.mxu0 0.0
  %182 = vmatprep.subr.mxu0 0.0
  %183 = vmatpush1.msra.mxu0 0.0
  %184 = vmatprep.subr.mxu0 0.0
  %185 = vmatpush1.msra.mxu0 0.0
  %186 = vmatprep.subr.mxu0 0.0
  %187 = vmatpush1.msra.mxu0 0.0
  %188 = vmatprep.subr.mxu0 0.0
  %189 = vmatpush1.msra.mxu0 0.0
  %190 = vmatprep.subr.mxu0 0.0
  %191 = vmatpush1.msra.mxu0 0.0
  %192 = vmatprep.subr.mxu0 0.0
  %193 = vmatpush1.msra.mxu0 0.0
  %194 = vmatprep.subr.mxu0 0.0
  %195 = vmatpush1.msra.mxu0 0.0
  %196 = vmatprep.subr.mxu0 0.0
  %197 = vmatpush1.msra.mxu0 0.0
  %198 = vmatprep.subr.mxu0 0.0
  %199 = vmatpush1.msra.mxu0 0.0
  %200 = vmatprep.mubr.f32.mxu0 0.0
  %201 = vmatmul.mubr.f32.gmra.mrb[0].mxu0 %v118
  %v202 = vpop.f32.mrb[0].mxu0
  %v203 = vadd.f32 %v99, %v202
  %v204 = vpop.f32.mrb[0].mxu0
  %v205 = vadd.f32 %v99, %v204
  %206 = vmatprep.mubr.f32.mxu0 0.0
  %207 = vmatmul.mubr.f32.gmra.mrb[0].mxu0 %v121
  %v208 = vpop.f32.mrb[0].mxu0
  %v209 = vadd.f32 %v104, %v208
  %v210 = vpop.f32.mrb[0].mxu0
  %v211 = vadd.f32 %v104, %v210
  %212 = vmatprep.mubr.f32.mxu0 0.0
  %213 = vmatmul.mubr.f32.gmra.mrb[0].mxu0 %v124
  %v214 = vpop.f32.mrb[0].mxu0
  %v215 = vadd.f32 %v109, %v214
  %v216 = vpop.f32.mrb[0].mxu0
  %v217 = vadd.f32 %v109, %v216
  %218 = vmatprep.mubr.f32.mxu0 0.0
  %219 = vmatmul.mubr.f32.gmra.mrb[0].mxu0 %v127
  %v220 = vpop.f32.mrb[0].mxu0
  %v221 = vadd.f32 %v114, %v220
  %v222 = vpop.f32.mrb[0].mxu0
  %v223 = vadd.f32 %v114, %v222
  %224 = vdwg.mxu0
  %v225 = vld [vmem:[%s4] sm:$0xff]
  %v226 = vld [vmem:[%s4 + $0x8] sm:$0xff]
  %v227 = vld [vmem:[%s4 + $0x10] sm:$0xff]
  %v228 = vld [vmem:[%s4 + $0x18] sm:$0xff]
  %v231 = vrot.slane %v86, 4
  %v232 = vrot.slane %v87, 4
  %v234 = vsel %vm116, %v225, 0
  %v237 = vsel %vm116, %v226, 0
  %v240 = vsel %vm116, %v227, 0
  %v243 = vsel %vm116, %v228, 0
  %v245 = vsel %vm129, %v231, 0
  %v247 = vsel %vm129, %v232, 0
  %249 = vmatprep.subr.mxu0 %v247
  %250 = vmatpush1.msra.mxu0 %v245
  %251 = vmatprep.subr.mxu0 0.0
  %252 = vmatpush1.msra.mxu0 0.0
  %253 = vmatprep.subr.mxu0 0.0
  %254 = vmatpush1.msra.mxu0 0.0
  %255 = vmatprep.subr.mxu0 0.0
  %256 = vmatpush1.msra.mxu0 0.0
  %257 = vmatprep.subr.mxu0 0.0
  %258 = vmatpush1.msra.mxu0 0.0
  %259 = vmatprep.subr.mxu0 0.0
  %260 = vmatpush1.msra.mxu0 0.0
  %261 = vmatprep.subr.mxu0 0.0
  %262 = vmatpush1.msra.mxu0 0.0
  %263 = vmatprep.subr.mxu0 0.0
  %264 = vmatpush1.msra.mxu0 0.0
  %265 = vmatprep.subr.mxu0 0.0
  %266 = vmatpush1.msra.mxu0 0.0
  %267 = vmatprep.subr.mxu0 0.0
  %268 = vmatpush1.msra.mxu0 0.0
  %269 = vmatprep.subr.mxu0 0.0
  %270 = vmatpush1.msra.mxu0 0.0
  %271 = vmatprep.subr.mxu0 0.0
  %272 = vmatpush1.msra.mxu0 0.0
  %273 = vmatprep.subr.mxu0 0.0
  %274 = vmatpush1.msra.mxu0 0.0
  %275 = vmatprep.subr.mxu0 0.0
  %276 = vmatpush1.msra.mxu0 0.0
  %277 = vmatprep.subr.mxu0 0.0
  %278 = vmatpush1.msra.mxu0 0.0
  %279 = vmatprep.subr.mxu0 0.0
  %280 = vmatpush1.msra.mxu0 0.0
  %281 = vmatprep.subr.mxu0 0.0
  %282 = vmatpush1.msra.mxu0 0.0
  %283 = vmatprep.subr.mxu0 0.0
  %284 = vmatpush1.msra.mxu0 0.0
  %285 = vmatprep.subr.mxu0 0.0
  %286 = vmatpush1.msra.mxu0 0.0
  %287 = vmatprep.subr.mxu0 0.0
  %288 = vmatpush1.msra.mxu0 0.0
  %289 = vmatprep.subr.mxu0 0.0
  %290 = vmatpush1.msra.mxu0 0.0
  %291 = vmatprep.subr.mxu0 0.0
  %292 = vmatpush1.msra.mxu0 0.0
  %293 = vmatprep.subr.mxu0 0.0
  %294 = vmatpush1.msra.mxu0 0.0
  %295 = vmatprep.subr.mxu0 0.0
  %296 = vmatpush1.msra.mxu0 0.0
  %297 = vmatprep.subr.mxu0 0.0
  %298 = vmatpush1.msra.mxu0 0.0
  %299 = vmatprep.subr.mxu0 0.0
  %300 = vmatpush1.msra.mxu0 0.0
  %301 = vmatprep.subr.mxu0 0.0
  %302 = vmatpush1.msra.mxu0 0.0
  %303 = vmatprep.subr.mxu0 0.0
  %304 = vmatpush1.msra.mxu0 0.0
  %305 = vmatprep.subr.mxu0 0.0
  %306 = vmatpush1.msra.mxu0 0.0
  %307 = vmatprep.subr.mxu0 0.0
  %308 = vmatpush1.msra.mxu0 0.0
  %309 = vmatprep.subr.mxu0 0.0
  %310 = vmatpush1.msra.mxu0 0.0
  %311 = vmatprep.subr.mxu0 0.0
  %312 = vmatpush1.msra.mxu0 0.0
  %313 = vmatprep.mubr.f32.mxu0 0.0
  %314 = vmatmul.mubr.f32.gmra.mrb[0].mxu0 %v234
  %v315 = vpop.f32.mrb[0].mxu0
  %v316 = vadd.f32 0.0, %v315
  %v317 = vpop.f32.mrb[0].mxu0
  %v318 = vadd.f32 0.0, %v317
  %319 = vmatprep.mubr.f32.mxu0 0.0
  %320 = vmatmul.mubr.f32.gmra.mrb[0].mxu0 %v237
  %v321 = vpop.f32.mrb[0].mxu0
  %v322 = vadd.f32 0.0, %v321
  %v323 = vpop.f32.mrb[0].mxu0
  %v324 = vadd.f32 0.0, %v323
  %325 = vmatprep.mubr.f32.mxu0 0.0
  %326 = vmatmul.mubr.f32.gmra.mrb[0].mxu0 %v240
  %v327 = vpop.f32.mrb[0].mxu0
  %v328 = vadd.f32 0.0, %v327
  %v329 = vpop.f32.mrb[0].mxu0
  %v330 = vadd.f32 0.0, %v329
  %331 = vmatprep.mubr.f32.mxu0 0.0
  %332 = vmatmul.mubr.f32.gmra.mrb[0].mxu0 %v243
  %v333 = vpop.f32.mrb[0].mxu0
  %v334 = vadd.f32 0.0, %v333
  %v335 = vpop.f32.mrb[0].mxu0
  %v336 = vadd.f32 0.0, %v335
  %337 = vdwg.mxu0
  %v338 = vadd.f32 %v203, %v316
  %v339 = vadd.f32 %v205, %v318
  %v340 = vadd.f32 %v209, %v322
  %v341 = vadd.f32 %v211, %v324
  %v342 = vadd.f32 %v215, %v328
  %v343 = vadd.f32 %v217, %v330
  %v344 = vadd.f32 %v221, %v334
  %v345 = vadd.f32 %v223, %v336
  %v346 = vtanh.pop %v338
  %v347 = vtanh.pop %v339
  %v348 = vtanh.pop %v340
  %v349 = vtanh.pop %v341
  %v350 = vtanh.pop %v342
  %v351 = vtanh.pop %v343
  %v352 = vtanh.pop %v344
  %v353 = vtanh.pop %v345
  %v354 = vld [vmem:[%s6] sm:$0xf]
  %v355 = vld [vmem:[%s7] sm:$0xf]
  %357 = vset.pattern.permute.xlu0 0
  %358 = vperm.xlu0 %357, %v355
  %v359 = vpop.permute.xlu0 %358
  %vm361 = vcmask 261120
  %v363 = vsel %vm361, %v354, 0
  %365 = vmatprep.subr.mxu0 %v347
  %366 = vmatpush1.msra.mxu0 %v346
  %367 = vmatprep.subr.mxu0 %v349
  %368 = vmatpush1.msra.mxu0 %v348
  %369 = vmatprep.subr.mxu0 %v351
  %370 = vmatpush1.msra.mxu0 %v350
  %371 = vmatprep.subr.mxu0 %v353
  %372 = vmatpush1.msra.mxu0 %v352
  %373 = vmatprep.subr.mxu0 0.0
  %374 = vmatpush1.msra.mxu0 0.0
  %375 = vmatprep.subr.mxu0 0.0
  %376 = vmatpush1.msra.mxu0 0.0
  %377 = vmatprep.subr.mxu0 0.0
  %378 = vmatpush1.msra.mxu0 0.0
  %379 = vmatprep.subr.mxu0 0.0
  %380 = vmatpush1.msra.mxu0 0.0
  %381 = vmatprep.subr.mxu0 0.0
  %382 = vmatpush1.msra.mxu0 0.0
  %383 = vmatprep.subr.mxu0 0.0
  %384 = vmatpush1.msra.mxu0 0.0
  %385 = vmatprep.subr.mxu0 0.0
  %386 = vmatpush1.msra.mxu0 0.0
  %387 = vmatprep.subr.mxu0 0.0
  %388 = vmatpush1.msra.mxu0 0.0
  %389 = vmatprep.subr.mxu0 0.0
  %390 = vmatpush1.msra.mxu0 0.0
  %391 = vmatprep.subr.mxu0 0.0
  %392 = vmatpush1.msra.mxu0 0.0
  %393 = vmatprep.subr.mxu0 0.0
  %394 = vmatpush1.msra.mxu0 0.0
  %395 = vmatprep.subr.mxu0 0.0
  %396 = vmatpush1.msra.mxu0 0.0
  %397 = vmatprep.subr.mxu0 0.0
  %398 = vmatpush1.msra.mxu0 0.0
  %399 = vmatprep.subr.mxu0 0.0
  %400 = vmatpush1.msra.mxu0 0.0
  %401 = vmatprep.subr.mxu0 0.0
  %402 = vmatpush1.msra.mxu0 0.0
  %403 = vmatprep.subr.mxu0 0.0
  %404 = vmatpush1.msra.mxu0 0.0
  %405 = vmatprep.subr.mxu0 0.0
  %406 = vmatpush1.msra.mxu0 0.0
  %407 = vmatprep.subr.mxu0 0.0
  %408 = vmatpush1.msra.mxu0 0.0
  %409 = vmatprep.subr.mxu0 0.0
  %410 = vmatpush1.msra.mxu0 0.0
  %411 = vmatprep.subr.mxu0 0.0
  %412 = vmatpush1.msra.mxu0 0.0
  %413 = vmatprep.subr.mxu0 0.0
  %414 = vmatpush1.msra.mxu0 0.0
  %415 = vmatprep.subr.mxu0 0.0
  %416 = vmatpush1.msra.mxu0 0.0
  %417 = vmatprep.subr.mxu0 0.0
  %418 = vmatpush1.msra.mxu0 0.0
  %419 = vmatprep.subr.mxu0 0.0
  %420 = vmatpush1.msra.mxu0 0.0
  %421 = vmatprep.subr.mxu0 0.0
  %422 = vmatpush1.msra.mxu0 0.0
  %423 = vmatprep.subr.mxu0 0.0
  %424 = vmatpush1.msra.mxu0 0.0
  %425 = vmatprep.subr.mxu0 0.0
  %426 = vmatpush1.msra.mxu0 0.0
  %427 = vmatprep.subr.mxu0 0.0
  %428 = vmatpush1.msra.mxu0 0.0
  %429 = vmatprep.mubr.f32.mxu0 0.0
  %430 = vmatmul.mubr.f32.gmra.mrb[0].mxu0 %v363
  %v431 = vpop.f32.mrb[0].mxu0
  %v432 = vadd.f32 %v359, %v431
  %v433 = vpop.f32.mrb[0].mxu0
  %v434 = vadd.f32 %v359, %v433
  %435 = vdwg.mxu0
  %v436 = vld [vmem:[%s2] sm:$0xff]
  %v437 = vld [vmem:[%s2 + $0x8] sm:$0xff]
  %v438 = vld [vmem:[%s2 + $0x10] sm:$0xff]
  %v439 = vld [vmem:[%s2 + $0x18] sm:$0xff]
  %441 = vset.pattern.permute.xlu0 0
  %442 = vperm.xlu0 %441, %v436
  %v443 = vpop.permute.xlu0 %442
  %446 = vset.pattern.permute.xlu0 0
  %447 = vperm.xlu0 %446, %v437
  %v448 = vpop.permute.xlu0 %447
  %451 = vset.pattern.permute.xlu0 0
  %452 = vperm.xlu0 %451, %v438
  %v453 = vpop.permute.xlu0 %452
  %456 = vset.pattern.permute.xlu0 0
  %457 = vperm.xlu0 %456, %v439
  %v458 = vpop.permute.xlu0 %457
  %v460 = vadd.f32 %v203, %v443
  %v461 = vadd.f32 %v205, %v443
  %v462 = vadd.f32 %v209, %v448
  %v463 = vadd.f32 %v211, %v448
  %v464 = vadd.f32 %v215, %v453
  %v465 = vadd.f32 %v217, %v453
  %v466 = vadd.f32 %v221, %v458
  %v467 = vadd.f32 %v223, %v458
  %v468 = vtanh.pop %v460
  %v469 = vtanh.pop %v461
  %v470 = vtanh.pop %v462
  %v471 = vtanh.pop %v463
  %v472 = vtanh.pop %v464
  %v473 = vtanh.pop %v465
  %v474 = vtanh.pop %v466
  %v475 = vtanh.pop %v467
  %v476 = vadd.f32 %v468, 0.0
  %v477 = vadd.f32 %v469, 0.0
  %v478 = vadd.f32 %v470, 0.0
  %v479 = vadd.f32 %v471, 0.0
  %v480 = vadd.f32 %v472, 0.0
  %v481 = vadd.f32 %v473, 0.0
  %v482 = vadd.f32 %v474, 0.0
  %v483 = vadd.f32 %v475, 0.0
  %484 = vset.pattern.permute.xlu0 1
  %485 = vperm.xlu0 %484, %v436
  %v486 = vpop.permute.xlu0 %485
  %488 = vset.pattern.permute.xlu0 1
  %489 = vperm.xlu0 %488, %v437
  %v490 = vpop.permute.xlu0 %489
  %492 = vset.pattern.permute.xlu0 1
  %493 = vperm.xlu0 %492, %v438
  %v494 = vpop.permute.xlu0 %493
  %496 = vset.pattern.permute.xlu0 1
  %497 = vperm.xlu0 %496, %v439
  %v498 = vpop.permute.xlu0 %497
  %v500 = vadd.f32 %v203, %v486
  %v501 = vadd.f32 %v205, %v486
  %v502 = vadd.f32 %v209, %v490
  %v503 = vadd.f32 %v211, %v490
  %v504 = vadd.f32 %v215, %v494
  %v505 = vadd.f32 %v217, %v494
  %v506 = vadd.f32 %v221, %v498
  %v507 = vadd.f32 %v223, %v498
  %v508 = vtanh.pop %v500
  %v509 = vtanh.pop %v501
  %v510 = vtanh.pop %v502
  %v511 = vtanh.pop %v503
  %v512 = vtanh.pop %v504
  %v513 = vtanh.pop %v505
  %v514 = vtanh.pop %v506
  %v515 = vtanh.pop %v507
  %v516 = vadd.f32 %v476, %v508
  %v517 = vadd.f32 %v477, %v509
  %v518 = vadd.f32 %v478, %v510
  %v519 = vadd.f32 %v479, %v511
  %v520 = vadd.f32 %v480, %v512
  %v521 = vadd.f32 %v481, %v513
  %v522 = vadd.f32 %v482, %v514
  %v523 = vadd.f32 %v483, %v515
  %524 = vset.pattern.permute.xlu0 2
  %525 = vperm.xlu0 %524, %v436
  %v526 = vpop.permute.xlu0 %525
  %528 = vset.pattern.permute.xlu0 2
  %529 = vperm.xlu0 %528, %v437
  %v530 = vpop.permute.xlu0 %529
  %532 = vset.pattern.permute.xlu0 2
  %533 = vperm.xlu0 %532, %v438
  %v534 = vpop.permute.xlu0 %533
  %536 = vset.pattern.permute.xlu0 2
  %537 = vperm.xlu0 %536, %v439
  %v538 = vpop.permute.xlu0 %537
  %v540 = vadd.f32 %v203, %v526
  %v541 = vadd.f32 %v205, %v526
  %v542 = vadd.f32 %v209, %v530
  %v543 = vadd.f32 %v211, %v530
  %v544 = vadd.f32 %v215, %v534
  %v545 = vadd.f32 %v217, %v534
  %v546 = vadd.f32 %v221, %v538
  %v547 = vadd.f32 %v223, %v538
  %v548 = vtanh.pop %v540
  %v549 = vtanh.pop %v541
  %v550 = vtanh.pop %v542
  %v551 = vtanh.pop %v543
  %v552 = vtanh.pop %v544
  %v553 = vtanh.pop %v545
  %v554 = vtanh.pop %v546
  %v555 = vtanh.pop %v547
  %v556 = vadd.f32 %v516, %v548
  %v557 = vadd.f32 %v517, %v549
  %v558 = vadd.f32 %v518, %v550
  %v559 = vadd.f32 %v519, %v551
  %v560 = vadd.f32 %v520, %v552
  %v561 = vadd.f32 %v521, %v553
  %v562 = vadd.f32 %v522, %v554
  %v563 = vadd.f32 %v523, %v555
  %564 = vset.pattern.permute.xlu0 3
  %565 = vperm.xlu0 %564, %v436
  %v566 = vpop.permute.xlu0 %565
  %568 = vset.pattern.permute.xlu0 3
  %569 = vperm.xlu0 %568, %v437
  %v570 = vpop.permute.xlu0 %569
  %572 = vset.pattern.permute.xlu0 3
  %573 = vperm.xlu0 %572, %v438
  %v574 = vpop.permute.xlu0 %573
  %576 = vset.pattern.permute.xlu0 3
  %577 = vperm.xlu0 %576, %v439
  %v578 = vpop.permute.xlu0 %577
  %v580 = vadd.f32 %v203, %v566
  %v581 = vadd.f32 %v205, %v566
  %v582 = vadd.f32 %v209, %v570
  %v583 = vadd.f32 %v211, %v570
  %v584 = vadd.f32 %v215, %v574
  %v585 = vadd.f32 %v217, %v574
  %v586 = vadd.f32 %v221, %v578
  %v587 = vadd.f32 %v223, %v578
  %v588 = vtanh.pop %v580
  %v589 = vtanh.pop %v581
  %v590 = vtanh.pop %v582
  %v591 = vtanh.pop %v583
  %v592 = vtanh.pop %v584
  %v593 = vtanh.pop %v585
  %v594 = vtanh.pop %v586
  %v595 = vtanh.pop %v587
  %v596 = vadd.f32 %v556, %v588
  %v597 = vadd.f32 %v557, %v589
  %v598 = vadd.f32 %v558, %v590
  %v599 = vadd.f32 %v559, %v591
  %v600 = vadd.f32 %v560, %v592
  %v601 = vadd.f32 %v561, %v593
  %v602 = vadd.f32 %v562, %v594
  %v603 = vadd.f32 %v563, %v595
  %604 = vset.pattern.permute.xlu0 4
  %605 = vperm.xlu0 %604, %v436
  %v606 = vpop.permute.xlu0 %605
  %608 = vset.pattern.permute.xlu0 4
  %609 = vperm.xlu0 %608, %v437
  %v610 = vpop.permute.xlu0 %609
  %612 = vset.pattern.permute.xlu0 4
  %613 = vperm.xlu0 %612, %v438
  %v614 = vpop.permute.xlu0 %613
  %616 = vset.pattern.permute.xlu0 4
  %617 = vperm.xlu0 %616, %v439
  %v618 = vpop.permute.xlu0 %617
  %v620 = vadd.f32 %v203, %v606
  %v621 = vadd.f32 %v205, %v606
  %v622 = vadd.f32 %v209, %v610
  %v623 = vadd.f32 %v211, %v610
  %v624 = vadd.f32 %v215, %v614
  %v625 = vadd.f32 %v217, %v614
  %v626 = vadd.f32 %v221, %v618
  %v627 = vadd.f32 %v223, %v618
  %v628 = vtanh.pop %v620
  %v629 = vtanh.pop %v621
  %v630 = vtanh.pop %v622
  %v631 = vtanh.pop %v623
  %v632 = vtanh.pop %v624
  %v633 = vtanh.pop %v625
  %v634 = vtanh.pop %v626
  %v635 = vtanh.pop %v627
  %v636 = vadd.f32 %v596, %v628
  %v637 = vadd.f32 %v597, %v629
  %v638 = vadd.f32 %v598, %v630
  %v639 = vadd.f32 %v599, %v631
  %v640 = vadd.f32 %v600, %v632
  %v641 = vadd.f32 %v601, %v633
  %v642 = vadd.f32 %v602, %v634
  %v643 = vadd.f32 %v603, %v635
  %644 = vset.pattern.permute.xlu0 5
  %645 = vperm.xlu0 %644, %v436
  %v646 = vpop.permute.xlu0 %645
  %648 = vset.pattern.permute.xlu0 5
  %649 = vperm.xlu0 %648, %v437
  %v650 = vpop.permute.xlu0 %649
  %652 = vset.pattern.permute.xlu0 5
  %653 = vperm.xlu0 %652, %v438
  %v654 = vpop.permute.xlu0 %653
  %656 = vset.pattern.permute.xlu0 5
  %657 = vperm.xlu0 %656, %v439
  %v658 = vpop.permute.xlu0 %657
  %v660 = vadd.f32 %v203, %v646
  %v661 = vadd.f32 %v205, %v646
  %v662 = vadd.f32 %v209, %v650
  %v663 = vadd.f32 %v211, %v650
  %v664 = vadd.f32 %v215, %v654
  %v665 = vadd.f32 %v217, %v654
  %v666 = vadd.f32 %v221, %v658
  %v667 = vadd.f32 %v223, %v658
  %v668 = vtanh.pop %v660
  %v669 = vtanh.pop %v661
  %v670 = vtanh.pop %v662
  %v671 = vtanh.pop %v663
  %v672 = vtanh.pop %v664
  %v673 = vtanh.pop %v665
  %v674 = vtanh.pop %v666
  %v675 = vtanh.pop %v667
  %v676 = vadd.f32 %v636, %v668
  %v677 = vadd.f32 %v637, %v669
  %v678 = vadd.f32 %v638, %v670
  %v679 = vadd.f32 %v639, %v671
  %v680 = vadd.f32 %v640, %v672
  %v681 = vadd.f32 %v641, %v673
  %v682 = vadd.f32 %v642, %v674
  %v683 = vadd.f32 %v643, %v675
  %684 = vset.pattern.permute.xlu0 6
  %685 = vperm.xlu0 %684, %v436
  %v686 = vpop.permute.xlu0 %685
  %688 = vset.pattern.permute.xlu0 6
  %689 = vperm.xlu0 %688, %v437
  %v690 = vpop.permute.xlu0 %689
  %692 = vset.pattern.permute.xlu0 6
  %693 = vperm.xlu0 %692, %v438
  %v694 = vpop.permute.xlu0 %693
  %696 = vset.pattern.permute.xlu0 6
  %697 = vperm.xlu0 %696, %v439
  %v698 = vpop.permute.xlu0 %697
  %v700 = vadd.f32 %v203, %v686
  %v701 = vadd.f32 %v205, %v686
  %v702 = vadd.f32 %v209, %v690
  %v703 = vadd.f32 %v211, %v690
  %v704 = vadd.f32 %v215, %v694
  %v705 = vadd.f32 %v217, %v694
  %v706 = vadd.f32 %v221, %v698
  %v707 = vadd.f32 %v223, %v698
  %v708 = vtanh.pop %v700
  %v709 = vtanh.pop %v701
  %v710 = vtanh.pop %v702
  %v711 = vtanh.pop %v703
  %v712 = vtanh.pop %v704
  %v713 = vtanh.pop %v705
  %v714 = vtanh.pop %v706
  %v715 = vtanh.pop %v707
  %v716 = vadd.f32 %v676, %v708
  %v717 = vadd.f32 %v677, %v709
  %v718 = vadd.f32 %v678, %v710
  %v719 = vadd.f32 %v679, %v711
  %v720 = vadd.f32 %v680, %v712
  %v721 = vadd.f32 %v681, %v713
  %v722 = vadd.f32 %v682, %v714
  %v723 = vadd.f32 %v683, %v715
  %724 = vset.pattern.permute.xlu0 7
  %725 = vperm.xlu0 %724, %v436
  %v726 = vpop.permute.xlu0 %725
  %728 = vset.pattern.permute.xlu0 7
  %729 = vperm.xlu0 %728, %v437
  %v730 = vpop.permute.xlu0 %729
  %732 = vset.pattern.permute.xlu0 7
  %733 = vperm.xlu0 %732, %v438
  %v734 = vpop.permute.xlu0 %733
  %736 = vset.pattern.permute.xlu0 7
  %737 = vperm.xlu0 %736, %v439
  %v738 = vpop.permute.xlu0 %737
  %v740 = vadd.f32 %v203, %v726
  %v741 = vadd.f32 %v205, %v726
  %v742 = vadd.f32 %v209, %v730
  %v743 = vadd.f32 %v211, %v730
  %v744 = vadd.f32 %v215, %v734
  %v745 = vadd.f32 %v217, %v734
  %v746 = vadd.f32 %v221, %v738
  %v747 = vadd.f32 %v223, %v738
  %v748 = vtanh.pop %v740
  %v749 = vtanh.pop %v741
  %v750 = vtanh.pop %v742
  %v751 = vtanh.pop %v743
  %v752 = vtanh.pop %v744
  %v753 = vtanh.pop %v745
  %v754 = vtanh.pop %v746
  %v755 = vtanh.pop %v747
  %v756 = vadd.f32 %v716, %v748
  %v757 = vadd.f32 %v717, %v749
  %v758 = vadd.f32 %v718, %v750
  %v759 = vadd.f32 %v719, %v751
  %v760 = vadd.f32 %v720, %v752
  %v761 = vadd.f32 %v721, %v753
  %v762 = vadd.f32 %v722, %v754
  %v763 = vadd.f32 %v723, %v755
  %764 = vset.pattern.permute.xlu0 8
  %765 = vperm.xlu0 %764, %v436
  %v766 = vpop.permute.xlu0 %765
  %768 = vset.pattern.permute.xlu0 8
  %769 = vperm.xlu0 %768, %v437
  %v770 = vpop.permute.xlu0 %769
  %772 = vset.pattern.permute.xlu0 8
  %773 = vperm.xlu0 %772, %v438
  %v774 = vpop.permute.xlu0 %773
  %776 = vset.pattern.permute.xlu0 8
  %777 = vperm.xlu0 %776, %v439
  %v778 = vpop.permute.xlu0 %777
  %v780 = vadd.f32 %v203, %v766
  %v781 = vadd.f32 %v205, %v766
  %v782 = vadd.f32 %v209, %v770
  %v783 = vadd.f32 %v211, %v770
  %v784 = vadd.f32 %v215, %v774
  %v785 = vadd.f32 %v217, %v774
  %v786 = vadd.f32 %v221, %v778
  %v787 = vadd.f32 %v223, %v778
  %v788 = vtanh.pop %v780
  %v789 = vtanh.pop %v781
  %v790 = vtanh.pop %v782
  %v791 = vtanh.pop %v783
  %v792 = vtanh.pop %v784
  %v793 = vtanh.pop %v785
  %v794 = vtanh.pop %v786
  %v795 = vtanh.pop %v787
  %v796 = vadd.f32 %v756, %v788
  %v797 = vadd.f32 %v757, %v789
  %v798 = vadd.f32 %v758, %v790
  %v799 = vadd.f32 %v759, %v791
  %v800 = vadd.f32 %v760, %v792
  %v801 = vadd.f32 %v761, %v793
  %v802 = vadd.f32 %v762, %v794
  %v803 = vadd.f32 %v763, %v795
  %804 = vset.pattern.permute.xlu0 9
  %805 = vperm.xlu0 %804, %v436
  %v806 = vpop.permute.xlu0 %805
  %808 = vset.pattern.permute.xlu0 9
  %809 = vperm.xlu0 %808, %v437
  %v810 = vpop.permute.xlu0 %809
  %812 = vset.pattern.permute.xlu0 9
  %813 = vperm.xlu0 %812, %v438
  %v814 = vpop.permute.xlu0 %813
  %816 = vset.pattern.permute.xlu0 9
  %817 = vperm.xlu0 %816, %v439
  %v818 = vpop.permute.xlu0 %817
  %v820 = vadd.f32 %v203, %v806
  %v821 = vadd.f32 %v205, %v806
  %v822 = vadd.f32 %v209, %v810
  %v823 = vadd.f32 %v211, %v810
  %v824 = vadd.f32 %v215, %v814
  %v825 = vadd.f32 %v217, %v814
  %v826 = vadd.f32 %v221, %v818
  %v827 = vadd.f32 %v223, %v818
  %v828 = vtanh.pop %v820
  %v829 = vtanh.pop %v821
  %v830 = vtanh.pop %v822
  %v831 = vtanh.pop %v823
  %v832 = vtanh.pop %v824
  %v833 = vtanh.pop %v825
  %v834 = vtanh.pop %v826
  %v835 = vtanh.pop %v827
  %v836 = vadd.f32 %v796, %v828
  %v837 = vadd.f32 %v797, %v829
  %v838 = vadd.f32 %v798, %v830
  %v839 = vadd.f32 %v799, %v831
  %v840 = vadd.f32 %v800, %v832
  %v841 = vadd.f32 %v801, %v833
  %v842 = vadd.f32 %v802, %v834
  %v843 = vadd.f32 %v803, %v835
  %844 = vset.pattern.permute.xlu0 10
  %845 = vperm.xlu0 %844, %v436
  %v846 = vpop.permute.xlu0 %845
  %848 = vset.pattern.permute.xlu0 10
  %849 = vperm.xlu0 %848, %v437
  %v850 = vpop.permute.xlu0 %849
  %852 = vset.pattern.permute.xlu0 10
  %853 = vperm.xlu0 %852, %v438
  %v854 = vpop.permute.xlu0 %853
  %856 = vset.pattern.permute.xlu0 10
  %857 = vperm.xlu0 %856, %v439
  %v858 = vpop.permute.xlu0 %857
  %v860 = vadd.f32 %v203, %v846
  %v861 = vadd.f32 %v205, %v846
  %v862 = vadd.f32 %v209, %v850
  %v863 = vadd.f32 %v211, %v850
  %v864 = vadd.f32 %v215, %v854
  %v865 = vadd.f32 %v217, %v854
  %v866 = vadd.f32 %v221, %v858
  %v867 = vadd.f32 %v223, %v858
  %v868 = vtanh.pop %v860
  %v869 = vtanh.pop %v861
  %v870 = vtanh.pop %v862
  %v871 = vtanh.pop %v863
  %v872 = vtanh.pop %v864
  %v873 = vtanh.pop %v865
  %v874 = vtanh.pop %v866
  %v875 = vtanh.pop %v867
  %v876 = vadd.f32 %v836, %v868
  %v877 = vadd.f32 %v837, %v869
  %v878 = vadd.f32 %v838, %v870
  %v879 = vadd.f32 %v839, %v871
  %v880 = vadd.f32 %v840, %v872
  %v881 = vadd.f32 %v841, %v873
  %v882 = vadd.f32 %v842, %v874
  %v883 = vadd.f32 %v843, %v875
  %884 = vset.pattern.permute.xlu0 11
  %885 = vperm.xlu0 %884, %v436
  %v886 = vpop.permute.xlu0 %885
  %888 = vset.pattern.permute.xlu0 11
  %889 = vperm.xlu0 %888, %v437
  %v890 = vpop.permute.xlu0 %889
  %892 = vset.pattern.permute.xlu0 11
  %893 = vperm.xlu0 %892, %v438
  %v894 = vpop.permute.xlu0 %893
  %896 = vset.pattern.permute.xlu0 11
  %897 = vperm.xlu0 %896, %v439
  %v898 = vpop.permute.xlu0 %897
  %v900 = vadd.f32 %v203, %v886
  %v901 = vadd.f32 %v205, %v886
  %v902 = vadd.f32 %v209, %v890
  %v903 = vadd.f32 %v211, %v890
  %v904 = vadd.f32 %v215, %v894
  %v905 = vadd.f32 %v217, %v894
  %v906 = vadd.f32 %v221, %v898
  %v907 = vadd.f32 %v223, %v898
  %v908 = vtanh.pop %v900
  %v909 = vtanh.pop %v901
  %v910 = vtanh.pop %v902
  %v911 = vtanh.pop %v903
  %v912 = vtanh.pop %v904
  %v913 = vtanh.pop %v905
  %v914 = vtanh.pop %v906
  %v915 = vtanh.pop %v907
  %v916 = vadd.f32 %v876, %v908
  %v917 = vadd.f32 %v877, %v909
  %v918 = vadd.f32 %v878, %v910
  %v919 = vadd.f32 %v879, %v911
  %v920 = vadd.f32 %v880, %v912
  %v921 = vadd.f32 %v881, %v913
  %v922 = vadd.f32 %v882, %v914
  %v923 = vadd.f32 %v883, %v915
  %924 = vset.pattern.permute.xlu0 12
  %925 = vperm.xlu0 %924, %v436
  %v926 = vpop.permute.xlu0 %925
  %928 = vset.pattern.permute.xlu0 12
  %929 = vperm.xlu0 %928, %v437
  %v930 = vpop.permute.xlu0 %929
  %932 = vset.pattern.permute.xlu0 12
  %933 = vperm.xlu0 %932, %v438
  %v934 = vpop.permute.xlu0 %933
  %936 = vset.pattern.permute.xlu0 12
  %937 = vperm.xlu0 %936, %v439
  %v938 = vpop.permute.xlu0 %937
  %v940 = vadd.f32 %v203, %v926
  %v941 = vadd.f32 %v205, %v926
  %v942 = vadd.f32 %v209, %v930
  %v943 = vadd.f32 %v211, %v930
  %v944 = vadd.f32 %v215, %v934
  %v945 = vadd.f32 %v217, %v934
  %v946 = vadd.f32 %v221, %v938
  %v947 = vadd.f32 %v223, %v938
  %v948 = vtanh.pop %v940
  %v949 = vtanh.pop %v941
  %v950 = vtanh.pop %v942
  %v951 = vtanh.pop %v943
  %v952 = vtanh.pop %v944
  %v953 = vtanh.pop %v945
  %v954 = vtanh.pop %v946
  %v955 = vtanh.pop %v947
  %v956 = vadd.f32 %v916, %v948
  %v957 = vadd.f32 %v917, %v949
  %v958 = vadd.f32 %v918, %v950
  %v959 = vadd.f32 %v919, %v951
  %v960 = vadd.f32 %v920, %v952
  %v961 = vadd.f32 %v921, %v953
  %v962 = vadd.f32 %v922, %v954
  %v963 = vadd.f32 %v923, %v955
  %964 = vset.pattern.permute.xlu0 13
  %965 = vperm.xlu0 %964, %v436
  %v966 = vpop.permute.xlu0 %965
  %968 = vset.pattern.permute.xlu0 13
  %969 = vperm.xlu0 %968, %v437
  %v970 = vpop.permute.xlu0 %969
  %972 = vset.pattern.permute.xlu0 13
  %973 = vperm.xlu0 %972, %v438
  %v974 = vpop.permute.xlu0 %973
  %976 = vset.pattern.permute.xlu0 13
  %977 = vperm.xlu0 %976, %v439
  %v978 = vpop.permute.xlu0 %977
  %v980 = vadd.f32 %v203, %v966
  %v981 = vadd.f32 %v205, %v966
  %v982 = vadd.f32 %v209, %v970
  %v983 = vadd.f32 %v211, %v970
  %v984 = vadd.f32 %v215, %v974
  %v985 = vadd.f32 %v217, %v974
  %v986 = vadd.f32 %v221, %v978
  %v987 = vadd.f32 %v223, %v978
  %v988 = vtanh.pop %v980
  %v989 = vtanh.pop %v981
  %v990 = vtanh.pop %v982
  %v991 = vtanh.pop %v983
  %v992 = vtanh.pop %v984
  %v993 = vtanh.pop %v985
  %v994 = vtanh.pop %v986
  %v995 = vtanh.pop %v987
  %v996 = vadd.f32 %v956, %v988
  %v997 = vadd.f32 %v957, %v989
  %v998 = vadd.f32 %v958, %v990
  %v999 = vadd.f32 %v959, %v991
  %v1000 = vadd.f32 %v960, %v992
  %v1001 = vadd.f32 %v961, %v993
  %v1002 = vadd.f32 %v962, %v994
  %v1003 = vadd.f32 %v963, %v995
  %1004 = vset.pattern.permute.xlu0 14
  %1005 = vperm.xlu0 %1004, %v436
  %v1006 = vpop.permute.xlu0 %1005
  %1008 = vset.pattern.permute.xlu0 14
  %1009 = vperm.xlu0 %1008, %v437
  %v1010 = vpop.permute.xlu0 %1009
  %1012 = vset.pattern.permute.xlu0 14
  %1013 = vperm.xlu0 %1012, %v438
  %v1014 = vpop.permute.xlu0 %1013
  %1016 = vset.pattern.permute.xlu0 14
  %1017 = vperm.xlu0 %1016, %v439
  %v1018 = vpop.permute.xlu0 %1017
  %v1020 = vadd.f32 %v203, %v1006
  %v1021 = vadd.f32 %v205, %v1006
  %v1022 = vadd.f32 %v209, %v1010
  %v1023 = vadd.f32 %v211, %v1010
  %v1024 = vadd.f32 %v215, %v1014
  %v1025 = vadd.f32 %v217, %v1014
  %v1026 = vadd.f32 %v221, %v1018
  %v1027 = vadd.f32 %v223, %v1018
  %v1028 = vtanh.pop %v1020
  %v1029 = vtanh.pop %v1021
  %v1030 = vtanh.pop %v1022
  %v1031 = vtanh.pop %v1023
  %v1032 = vtanh.pop %v1024
  %v1033 = vtanh.pop %v1025
  %v1034 = vtanh.pop %v1026
  %v1035 = vtanh.pop %v1027
  %v1036 = vadd.f32 %v996, %v1028
  %v1037 = vadd.f32 %v997, %v1029
  %v1038 = vadd.f32 %v998, %v1030
  %v1039 = vadd.f32 %v999, %v1031
  %v1040 = vadd.f32 %v1000, %v1032
  %v1041 = vadd.f32 %v1001, %v1033
  %v1042 = vadd.f32 %v1002, %v1034
  %v1043 = vadd.f32 %v1003, %v1035
  %1044 = vset.pattern.permute.xlu0 15
  %1045 = vperm.xlu0 %1044, %v436
  %v1046 = vpop.permute.xlu0 %1045
  %1048 = vset.pattern.permute.xlu0 15
  %1049 = vperm.xlu0 %1048, %v437
  %v1050 = vpop.permute.xlu0 %1049
  %1052 = vset.pattern.permute.xlu0 15
  %1053 = vperm.xlu0 %1052, %v438
  %v1054 = vpop.permute.xlu0 %1053
  %1056 = vset.pattern.permute.xlu0 15
  %1057 = vperm.xlu0 %1056, %v439
  %v1058 = vpop.permute.xlu0 %1057
  %v1060 = vadd.f32 %v203, %v1046
  %v1061 = vadd.f32 %v205, %v1046
  %v1062 = vadd.f32 %v209, %v1050
  %v1063 = vadd.f32 %v211, %v1050
  %v1064 = vadd.f32 %v215, %v1054
  %v1065 = vadd.f32 %v217, %v1054
  %v1066 = vadd.f32 %v221, %v1058
  %v1067 = vadd.f32 %v223, %v1058
  %v1068 = vtanh.pop %v1060
  %v1069 = vtanh.pop %v1061
  %v1070 = vtanh.pop %v1062
  %v1071 = vtanh.pop %v1063
  %v1072 = vtanh.pop %v1064
  %v1073 = vtanh.pop %v1065
  %v1074 = vtanh.pop %v1066
  %v1075 = vtanh.pop %v1067
  %v1076 = vadd.f32 %v1036, %v1068
  %v1077 = vadd.f32 %v1037, %v1069
  %v1078 = vadd.f32 %v1038, %v1070
  %v1079 = vadd.f32 %v1039, %v1071
  %v1080 = vadd.f32 %v1040, %v1072
  %v1081 = vadd.f32 %v1041, %v1073
  %v1082 = vadd.f32 %v1042, %v1074
  %v1083 = vadd.f32 %v1043, %v1075
  %v1084 = vld [vmem:[%s8] sm:$0xf]
  %v1086 = vsel %vm361, %v1084, 0
  %1088 = vmatprep.subr.mxu0 %v1077
  %1089 = vmatpush1.msra.mxu0 %v1076
  %1090 = vmatprep.subr.mxu0 %v1079
  %1091 = vmatpush1.msra.mxu0 %v1078
  %1092 = vmatprep.subr.mxu0 %v1081
  %1093 = vmatpush1.msra.mxu0 %v1080
  %1094 = vmatprep.subr.mxu0 %v1083
  %1095 = vmatpush1.msra.mxu0 %v1082
  %1096 = vmatprep.subr.mxu0 0.0
  %1097 = vmatpush1.msra.mxu0 0.0
  %1098 = vmatprep.subr.mxu0 0.0
  %1099 = vmatpush1.msra.mxu0 0.0
  %1100 = vmatprep.subr.mxu0 0.0
  %1101 = vmatpush1.msra.mxu0 0.0
  %1102 = vmatprep.subr.mxu0 0.0
  %1103 = vmatpush1.msra.mxu0 0.0
  %1104 = vmatprep.subr.mxu0 0.0
  %1105 = vmatpush1.msra.mxu0 0.0
  %1106 = vmatprep.subr.mxu0 0.0
  %1107 = vmatpush1.msra.mxu0 0.0
  %1108 = vmatprep.subr.mxu0 0.0
  %1109 = vmatpush1.msra.mxu0 0.0
  %1110 = vmatprep.subr.mxu0 0.0
  %1111 = vmatpush1.msra.mxu0 0.0
  %1112 = vmatprep.subr.mxu0 0.0
  %1113 = vmatpush1.msra.mxu0 0.0
  %1114 = vmatprep.subr.mxu0 0.0
  %1115 = vmatpush1.msra.mxu0 0.0
  %1116 = vmatprep.subr.mxu0 0.0
  %1117 = vmatpush1.msra.mxu0 0.0
  %1118 = vmatprep.subr.mxu0 0.0
  %1119 = vmatpush1.msra.mxu0 0.0
  %1120 = vmatprep.subr.mxu0 0.0
  %1121 = vmatpush1.msra.mxu0 0.0
  %1122 = vmatprep.subr.mxu0 0.0
  %1123 = vmatpush1.msra.mxu0 0.0
  %1124 = vmatprep.subr.mxu0 0.0
  %1125 = vmatpush1.msra.mxu0 0.0
  %1126 = vmatprep.subr.mxu0 0.0
  %1127 = vmatpush1.msra.mxu0 0.0
  %1128 = vmatprep.subr.mxu0 0.0
  %1129 = vmatpush1.msra.mxu0 0.0
  %1130 = vmatprep.subr.mxu0 0.0
  %1131 = vmatpush1.msra.mxu0 0.0
  %1132 = vmatprep.subr.mxu0 0.0
  %1133 = vmatpush1.msra.mxu0 0.0
  %1134 = vmatprep.subr.mxu0 0.0
  %1135 = vmatpush1.msra.mxu0 0.0
  %1136 = vmatprep.subr.mxu0 0.0
  %1137 = vmatpush1.msra.mxu0 0.0
  %1138 = vmatprep.subr.mxu0 0.0
  %1139 = vmatpush1.msra.mxu0 0.0
  %1140 = vmatprep.subr.mxu0 0.0
  %1141 = vmatpush1.msra.mxu0 0.0
  %1142 = vmatprep.subr.mxu0 0.0
  %1143 = vmatpush1.msra.mxu0 0.0
  %1144 = vmatprep.subr.mxu0 0.0
  %1145 = vmatpush1.msra.mxu0 0.0
  %1146 = vmatprep.subr.mxu0 0.0
  %1147 = vmatpush1.msra.mxu0 0.0
  %1148 = vmatprep.subr.mxu0 0.0
  %1149 = vmatpush1.msra.mxu0 0.0
  %1150 = vmatprep.subr.mxu0 0.0
  %1151 = vmatpush1.msra.mxu0 0.0
  %1152 = vmatprep.mubr.f32.mxu0 0.0
  %1153 = vmatmul.mubr.f32.gmra.mrb[0].mxu0 %v1086
  %v1154 = vpop.f32.mrb[0].mxu0
  %v1155 = vadd.f32 0.0, %v1154
  %v1156 = vpop.f32.mrb[0].mxu0
  %v1157 = vadd.f32 0.0, %v1156
  %1158 = vdwg.mxu0
  %v1159 = vmul.f32 %v1155, 0.0625
  %v1160 = vmul.f32 %v1157, 0.0625
  %v1161 = vld [vmem:[%s9] sm:$0xf]
  %1163 = vset.pattern.permute.xlu0 0
  %1164 = vperm.xlu0 %1163, %v1161
  %v1165 = vpop.permute.xlu0 %1164
  %v1167 = vadd.f32 %v1159, %v1165
  %v1168 = vadd.f32 %v1160, %v1165
  %v1169 = vsub.f32 %v432, %v1167
  %v1170 = vsub.f32 %v434, %v1168
  %v1171 = vld [vmem:[%s76] sm:$0xff]
  %v1173 = vcombine.high %v1171, %v1171
  %v1175 = vsub.f32 %v1169, %v1171
  %v1176 = vsub.f32 %v1170, %v1173
  %v1177 = vmul.f32 %v1175, %v1175
  %v1179 = vunpack.c.l.s4 1983009808
  %v1180 = vunpack.c.0.s8 %v1179
  %v1181 = vlaneseq
  %v1182 = vshrl.u32 %v1181, 7
  %v1183 = vsub.s32 %v1180, %v1182
  %v1184 = vrot.slane %v1177, %v1183
  %v1185 = vmul.f32 %v1176, %v1176
  %v1187 = vunpack.c.l.s4 1983009808
  %v1188 = vunpack.c.0.s8 %v1187
  %v1189 = vlaneseq
  %v1190 = vshrl.u32 %v1189, 7
  %v1191 = vsub.s32 %v1188, %v1190
  %v1192 = vrot.slane %v1185, %v1191
  %v1193 = vcombine.low %v1184, %v1192
  %v1194 = vcombine.high %v1184, %v1192
  %v1196 = vunpack.c.l.s4 1934713408
  %v1197 = vunpack.c.0.s8 %v1196
  %v1198 = vlaneseq
  %v1199 = vshrl.u32 %v1198, 7
  %v1200 = vsub.s32 %v1197, %v1199
  %v1201 = vrot.slane %v1193, %v1200
  %v1203 = vunpack.c.l.s4 1934713408
  %v1204 = vunpack.c.0.s8 %v1203
  %v1205 = vlaneseq
  %v1206 = vshrl.u32 %v1205, 7
  %v1207 = vsub.s32 %v1204, %v1206
  %v1208 = vrot.slane %v1194, %v1207
  %v1209 = vcombine.high %v1201, 0.0
  %v1210 = vcombine.high %v1208, 0.0
  %vm1211 = vcmask 1041408
  %v1212 = vsel %vm1211, %v1201, 0.0
  %v1213 = vsel %vm1211, %v1209, 0.0
  %v1214 = vadd.f32 %v1212, %v1213
  %v1215 = vsel %vm1211, %v1208, 0.0
  %v1216 = vadd.f32 %v1214, %v1215
  %v1217 = vsel %vm1211, %v1210, 0.0
  %v1218 = vadd.f32 %v1216, %v1217
  %v1219 = vrot.slane %v1218, 4
  %v1220 = vadd.f32 %v1218, %v1219
  %v1221 = vrot.slane %v1220, 2
  %v1222 = vadd.f32 %v1220, %v1221
  %v1223 = vrot.slane %v1222, 1
  %v1224 = vadd.f32 %v1222, %v1223
  %v1225 = vld [vmem:[#allocation2] sm:$0x1]
  %v1226 = vadd.f32 %v1225, %v1224
  %1227 = vst [vmem:[#allocation2] sm:$0x1] %v1226
  // Predicated region
  $region46: #{integro_pinn_loss.1} parent=0 // pred_check
    %p1228 = pneg %p79
  $region47: #{integro_pinn_loss.1} parent=0 // pred_check_branch
    %1230 = sbr.rel (%p1228) target = $region49
  $region48: #{integro_pinn_loss.1} parent=0 // pred_region
    %v1231 = vld [vmem:[#allocation2] sm:$0x1]
    %v1233 = vlaneseq
    %v1234 = vshrl.u32 %v1233, 7
    %v1235 = vsub.s32 0, %v1234
    %v1236 = vrot.slane %v1231, %v1235
    %v1238 = vadd.f32 %v1236, 0.0
    %1239 = vst [vmem:[%s10] sm:$0xff] %v1238
  $region49: #{integro_pinn_loss.1} parent=0 // pred_fallthru
    _
  // Predicated region
  $region50: #{integro_pinn_loss.1} parent=0 // pred_check
    _
  $region51: #{integro_pinn_loss.1} parent=0 // pred_check_branch
    %1241 = sbr.rel (0) target = $region53
  $region52: #{integro_pinn_loss.1} parent=0 // pred_region
    _
  $region53: #{integro_pinn_loss.1} parent=0 // pred_fallthru
    _
  // Predicated region
  $region54: #{integro_pinn_loss.1} parent=0 // pred_check
    _
  $region55: #{integro_pinn_loss.1} parent=0 // pred_check_branch
    %1243 = sbr.rel (0) target = $region57
  $region56: #{integro_pinn_loss.1} parent=0 // pred_region
    _
  $region57: #{integro_pinn_loss.1} parent=0 // pred_fallthru
    _

</llo_original>
